<compile_context>
chip_gen: v6e
topology: v6e:2x2x1
jax: 0.10.0
libtpu: 0.0.40
codegen_flags: <defaults>
</compile_context>

<pallas_src>
import jax
import jax.numpy as jnp
from jax import lax
from jax.experimental import pallas as pl
from jax.experimental.pallas import tpu as pltpu

_SUBLANE = 8
_LANE = 128


def _round_up(x: int, m: int) -> int:
    return (x + m - 1) // m * m


def _pick_tile(dim: int, gran: int, cap: int) -> int:
    """Tile size: multiple of `gran`, <= cap, with small padding waste on `dim`."""
    dim_g = _round_up(max(dim, 1), gran)
    if dim_g <= cap:
        return dim_g                      # single block along this axis
    tol = max(gran, dim_g // 8)           # accept <= ~12.5% padding waste
    t = (cap // gran) * gran
    while t > gran:
        if _round_up(dim_g, t) - dim_g <= tol:
            return t
        t -= gran
    return gran


def _monotone_kernel(x_ref, w_ref, b_ref, o_ref):
    # x_ref : (bm, bk)  VMEM  activations tile
    # w_ref : (bn, bk)  VMEM  RAW weights tile, native (out_dim, in_dim) layout
    # b_ref : (1,  bn)  VMEM  bias tile
    # o_ref : (bm, bn)  VMEM  f32 output tile, resident across K axis (= accumulator)
    k = pl.program_id(2)

    w = w_ref[...]
    # Squaring is a couple of VPU ops that co-issue under the MXU (free).
    # "NT" contraction (contract last dim of both) is handled natively by the MXU.
    partial = lax.dot_general(
        x_ref[...],
        w * w,
        dimension_numbers=(((1,), (1,)), ((), ())),
        preferred_element_type=jnp.float32,
    )

    @pl.when(k == 0)
    def _first():
        o_ref[...] = partial              # direct store: no zero-fill pass

    @pl.when(k > 0)
    def _accumulate():
        o_ref[...] += partial

    @pl.when(k == pl.num_programs(2) - 1)
    def _finalize():
        # Epilogue: bias add + tanh (EUP), in place on the resident block.
        o_ref[...] = jnp.tanh(o_ref[...] + b_ref[...]).astype(o_ref.dtype)


def monotone_layer(x, weights, bias):
    """Forward pass of _MonotoneLayer.

    x       : (B, in_dim)          f32
    weights : (1, out_dim, in_dim) f32 (unsquared, as stored by the module)
    bias    : (1, out_dim)         f32
    returns : (B, out_dim)         f32
    """
    B, K = x.shape
    _, N, Kw = weights.shape
    assert K == Kw, f"in_dim mismatch: x has {K}, weights have {Kw}"

    # --- tile selection: pad only to (8,128) granularity, tiles ~divide dims ---
    bm = _pick_tile(B, _SUBLANE, 512)
    bn = _pick_tile(N, _LANE, 512)
    bk = _pick_tile(K, _LANE, 2048)

    Bp = _round_up(B, bm)
    Np = _round_up(N, bn)
    Kp = _round_up(K, bk)

    # v7x has 2 TensorCores; only the "parallel" grid axes shard across them.
    # If batch+out_dim collapse to one block, split N into 128-wide tiles.
    if Bp // bm == 1 and Np // bn == 1 and Np >= 2 * _LANE:
        bn = _LANE

    # Zero-pad: padded K columns contribute 0 (0**2 = 0); padded B rows / N
    # columns are sliced off at the end, so semantics are unchanged.
    w2d = weights.reshape(N, K)           # native (out_dim, in_dim) layout, no transpose
    x_p = x if (Bp, Kp) == (B, K) else jnp.pad(x, ((0, Bp - B), (0, Kp - K)))
    w_p = w2d if (Np, Kp) == (N, K) else jnp.pad(w2d, ((0, Np - N), (0, Kp - K)))
    b_p = bias if Np == N else jnp.pad(bias, ((0, 0), (0, Np - N)))

    grid = (Bp // bm, Np // bn, Kp // bk)

    # Double-buffered working set (x, W, bias, out tiles), f32.
    work_bytes = 2 * 4 * (bm * bk + bn * bk + bn + bm * bn)
    # >=32 MiB (lifts v5e's 16 MiB scoped default), <=48 MiB (safe on v7x's 64 MiB).
    vmem_limit = int(min(max(work_bytes + (8 << 20), 32 << 20), 48 << 20))

    out_padded = pl.pallas_call(
        _monotone_kernel,
        out_shape=jax.ShapeDtypeStruct((Bp, Np), jnp.float32),
        grid_spec=pltpu.PrefetchScalarGridSpec(
            num_scalar_prefetch=0,
            grid=grid,
            in_specs=[
                pl.BlockSpec((bm, bk), lambda i, j, k: (i, k)),   # x tile
                pl.BlockSpec((bn, bk), lambda i, j, k: (j, k)),   # raw W tile (N,K)
                pl.BlockSpec((1, bn), lambda i, j, k: (0, j)),    # bias tile
            ],
            out_specs=pl.BlockSpec((bm, bn), lambda i, j, k: (i, j)),
        ),
        compiler_params=pltpu.CompilerParams(
            # Batch and out_dim axes are independent -> parallel (dual-TC on v7x);
            # K is the reduction with a resident output block -> arbitrary (last).
            dimension_semantics=("parallel", "parallel", "arbitrary"),
            vmem_limit_bytes=vmem_limit,
        ),
    )(x_p, w_p, b_p)

    out = out_padded if (Bp, Np) == (B, N) else out_padded[:B, :N]
    return out.astype(x.dtype)


def _reference(x, weights, bias):
    # Pure-JAX mirror of the PyTorch forward.
    return jnp.tanh(
        jnp.squeeze(jnp.square(weights) @ x[..., None], axis=-1) + bias
    )


if __name__ == "__main__":
    key = jax.random.PRNGKey(0)

    # --- small shapes consistent with the module's forward ---------------------
    B, in_dim, out_dim = 8, 32, 16
    kx, kw, kb = jax.random.split(key, 3)
    x = jax.random.uniform(kx, (B, in_dim), dtype=jnp.float32)
    weights = jax.random.uniform(kw, (1, out_dim, in_dim), dtype=jnp.float32)
    bias = jax.random.uniform(kb, (1, out_dim), dtype=jnp.float32)

    y = monotone_layer(x, weights, bias)
    jax.block_until_ready(y)
    assert y.shape == (B, out_dim)
    assert jnp.allclose(y, _reference(x, weights, bias), atol=2e-5, rtol=1e-5)

    # --- larger shapes: exercise batch / out_dim / K tiling and padding --------
    B2, in2, out2 = 512, 1024, 300
    kx2, kw2, kb2 = jax.random.split(jax.random.PRNGKey(1), 3)
    x2 = jax.random.uniform(kx2, (B2, in2), dtype=jnp.float32)
    w2 = jax.random.uniform(kw2, (1, out2, in2), dtype=jnp.float32) * 0.05
    b2 = jax.random.uniform(kb2, (1, out2), dtype=jnp.float32)

    y2 = monotone_layer(x2, w2, b2)
    jax.block_until_ready(y2)
    assert y2.shape == (B2, out2)
    assert jnp.allclose(y2, _reference(x2, w2, b2), atol=2e-4, rtol=1e-4)

    print("KERNEL_OK")
</pallas_src>

<mosaic_0001>
module attributes {stable_mosaic.version = 11 : i64} {
  func.func @_monotone_kernel(%arg0: i32, %arg1: i32, %arg2: i32, %arg3: memref<8x128xf32, #tpu.memory_space<vmem>>, %arg4: memref<128x128xf32, #tpu.memory_space<vmem>>, %arg5: memref<1x128xf32, #tpu.memory_space<vmem>>, %arg6: memref<8x128xf32, #tpu.memory_space<vmem>>) attributes {dimension_semantics = [#tpu.dimension_semantics<parallel>, #tpu.dimension_semantics<parallel>, #tpu.dimension_semantics<arbitrary>], iteration_bounds = array<i64: 1, 1, 1>, scalar_prefetch = 0 : i64, scratch_operands = 0 : i64, tpu.core_type = #tpu.core_type<tc>, window_params = [{transform_indices = @transform_0, window_bounds = array<i64: 8, 128>}, {transform_indices = @transform_1, window_bounds = array<i64: 128, 128>}, {transform_indices = @transform_2, window_bounds = array<i64: 1, 128>}, {transform_indices = @transform_3, window_bounds = array<i64: 8, 128>}]} {
    %c0 = arith.constant 0 : index
    %c0_0 = arith.constant 0 : index
    %0 = vector.load %arg4[%c0, %c0_0] : memref<128x128xf32, #tpu.memory_space<vmem>>, vector<128x128xf32>
    %c0_1 = arith.constant 0 : index
    %c0_2 = arith.constant 0 : index
    %1 = vector.load %arg3[%c0_1, %c0_2] : memref<8x128xf32, #tpu.memory_space<vmem>>, vector<8x128xf32>
    %2 = arith.mulf %0, %0 : vector<128x128xf32>
    %cst = arith.constant dense<0.000000e+00> : vector<8x128xf32>
    %3 = tpu.matmul %1, %2, %cst {dimension_numbers = #tpu.dot_dimension_numbers<[1], [1], [0], [0], [0, 0, 1, 0], [], []>} : vector<8x128xf32>, vector<128x128xf32>, vector<8x128xf32> -> vector<8x128xf32>
    %c0_i32 = arith.constant 0 : i32
    %4 = arith.cmpi eq, %arg2, %c0_i32 : i32
    %5 = arith.extui %4 : i1 to i32
    %c0_i32_3 = arith.constant 0 : i32
    %6 = arith.cmpi ne, %5, %c0_i32_3 : i32
    scf.if %6 {
      %c0_8 = arith.constant 0 : index
      %c0_9 = arith.constant 0 : index
      %13 = vector.load %arg6[%c0_8, %c0_9] : memref<8x128xf32, #tpu.memory_space<vmem>>, vector<8x128xf32>
      tpu.vector_store %arg6[%c0_8, %c0_9], %3 {strides = array<i32>} : memref<8x128xf32, #tpu.memory_space<vmem>>, vector<8x128xf32>,
    } else {
    }
    %c0_i32_4 = arith.constant 0 : i32
    %7 = arith.cmpi sgt, %arg2, %c0_i32_4 : i32
    %8 = arith.extui %7 : i1 to i32
    %c0_i32_5 = arith.constant 0 : i32
    %9 = arith.cmpi ne, %8, %c0_i32_5 : i32
    scf.if %9 {
      %c0_8 = arith.constant 0 : index
      %c0_9 = arith.constant 0 : index
      %13 = vector.load %arg6[%c0_8, %c0_9] : memref<8x128xf32, #tpu.memory_space<vmem>>, vector<8x128xf32>
      %14 = arith.addf %13, %3 : vector<8x128xf32>
      %c0_10 = arith.constant 0 : index
      %c0_11 = arith.constant 0 : index
      %15 = vector.load %arg6[%c0_10, %c0_11] : memref<8x128xf32, #tpu.memory_space<vmem>>, vector<8x128xf32>
      tpu.vector_store %arg6[%c0_10, %c0_11], %14 {strides = array<i32>} : memref<8x128xf32, #tpu.memory_space<vmem>>, vector<8x128xf32>,
    } else {
    }
    %c0_i32_6 = arith.constant 0 : i32
    %10 = arith.cmpi eq, %arg2, %c0_i32_6 : i32
    %11 = arith.extui %10 : i1 to i32
    %c0_i32_7 = arith.constant 0 : i32
    %12 = arith.cmpi ne, %11, %c0_i32_7 : i32
    scf.if %12 {
      %c0_8 = arith.constant 0 : index
      %c0_9 = arith.constant 0 : index
      %13 = vector.load %arg6[%c0_8, %c0_9] : memref<8x128xf32, #tpu.memory_space<vmem>>, vector<8x128xf32>
      %c0_10 = arith.constant 0 : index
      %c0_11 = arith.constant 0 : index
      %14 = vector.load %arg5[%c0_10, %c0_11] : memref<1x128xf32, #tpu.memory_space<vmem>>, vector<1x128xf32>
      %15 = vector.broadcast %14 : vector<1x128xf32> to vector<8x128xf32>
      %16 = arith.addf %13, %15 : vector<8x128xf32>
      %17 = math.tanh %16 : vector<8x128xf32>
      %c0_12 = arith.constant 0 : index
      %c0_13 = arith.constant 0 : index
      %18 = vector.load %arg6[%c0_12, %c0_13] : memref<8x128xf32, #tpu.memory_space<vmem>>, vector<8x128xf32>
      tpu.vector_store %arg6[%c0_12, %c0_13], %17 {strides = array<i32>} : memref<8x128xf32, #tpu.memory_space<vmem>>, vector<8x128xf32>,
    } else {
    }
    return
  }
  func.func @transform_0(%arg0: i32, %arg1: i32, %arg2: i32) -> (i32, i32) {
    %c0_i32 = arith.constant 0 : i32
    return %arg0, %arg2 : i32, i32
  }
  func.func @transform_1(%arg0: i32, %arg1: i32, %arg2: i32) -> (i32, i32) {
    %c0_i32 = arith.constant 0 : i32
    return %arg1, %arg2 : i32, i32
  }
  func.func @transform_2(%arg0: i32, %arg1: i32, %arg2: i32) -> (i32, i32) {
    %c0_i32 = arith.constant 0 : i32
    %c0_i32_0 = arith.constant 0 : i32
    return %c0_i32, %arg1 : i32, i32
  }
  func.func @transform_3(%arg0: i32, %arg1: i32, %arg2: i32) -> (i32, i32) {
    %c0_i32 = arith.constant 0 : i32
    return %arg0, %arg1 : i32, i32
  }
}

</mosaic_0001>

<llo_original>
// kernel: tpu_custom_call.1
$region0: #{tpu_custom_call.1}
  #allocation0 [shape = 'u32[]', space=smem, size = 0x4, offset = 0x4, fixed_abs, tag = 'smem constant byte address 0x4 - core index']
  #allocation1 [shape = 'u32[144,128]{1,0:T(1,128)}', space=vmem, size = 0x12000, scoped, tag = 'internal scratch']
  %s0 = inlined_call_operand.hbm [shape: f32[8,128], index: 0, kind: input, shape index: {}]
  %s1 = inlined_call_operand.hbm [shape: f32[128,128], index: 1, kind: input, shape index: {}]
  %s2 = inlined_call_operand.vmem [shape: f32[1,128], index: 2, kind: input, shape index: {}]
  %s3 = inlined_call_operand.hbm [shape: f32[8,128], index: 3, kind: output, shape index: {}]
  %s4 = sld [smem:[#allocation0]]
  $region42: #{tpu_custom_call.1} parent=0
    _
  %s6 = ssub.s32 1, %s4
  %s7 = scalar_select 0, %s6, %s4
  $region1: #{tpu_custom_call.1} parent=0
    #allocation2 [shape = 'u8[4096]{0}', space=vmem, size = 0x1000, scoped, tag = 'input window, operand 0, single buffered']
    #allocation3 [shape = 's32[1]{0}', space=sflag, size = 0x4, scoped, tag = 'scoped memory for tpu_custom_call.1']
    #allocation4 [shape = 's32[1]{0}', space=sflag, size = 0x4, scoped, tag = 'scoped memory for tpu_custom_call.1']
    #allocation5 [shape = 'u8[65536]{0}', space=vmem, size = 0x10000, scoped, tag = 'input window, operand 1, single buffered']
    #allocation6 [shape = 's32[1]{0}', space=sflag, size = 0x4, scoped, tag = 'scoped memory for tpu_custom_call.1']
    #allocation7 [shape = 'u8[4096]{0}', space=vmem, size = 0x1000, scoped, tag = 'output window, operand 0, single buffered']
    %8 = vsyncpa [#allocation3], 0
    %9 = vsyncpa [#allocation6], 0
    %10 = vsyncpa [#allocation4], 0
    // Predicated region
    $region2: #{tpu_custom_call.1} parent=1 // pred_check
      _
    $region3: #{tpu_custom_call.1} parent=1 // pred_check_branch
      %12 = sbr.rel (0) target = $region5
    $region4: #{tpu_custom_call.1} parent=1 // pred_region
      %s14 = ssub.s32 128, 128
      %15 = vsyncadd [#allocation3], %s14
      %s17 = sshll.u32 [#allocation2], 4
      %s18 = int_to_ptr.vmem [resolvable:$true] %s17
      %20 = dma.hbm_to_vmem [thread:$0]  %s0, 128, %s18, [#allocation3]
    $region5: #{tpu_custom_call.1} parent=1 // pred_fallthru
      _
    // Predicated region
    $region6: #{tpu_custom_call.1} parent=1 // pred_check
      _
    $region7: #{tpu_custom_call.1} parent=1 // pred_check_branch
      %22 = sbr.rel (0) target = $region9
    $region8: #{tpu_custom_call.1} parent=1 // pred_region
      %s24 = ssub.s32 2048, 2048
      %25 = vsyncadd [#allocation6], %s24
      %s26 = sshll.u32 [#allocation5], 4
      %s27 = int_to_ptr.vmem [resolvable:$true] %s26
      %32 = dma.hbm_to_vmem [thread:$0]  %s1, 2048, %s27, [#allocation6], 128, 128, 8
    $region9: #{tpu_custom_call.1} parent=1 // pred_fallthru
      _
    // Predicated region
    $region10: #{tpu_custom_call.1} parent=1 // pred_check
      _
    $region11: #{tpu_custom_call.1} parent=1 // pred_check_branch
      %34 = sbr.rel (0) target = $region13
    $region12: #{tpu_custom_call.1} parent=1 // pred_region
      _
    $region13: #{tpu_custom_call.1} parent=1 // pred_fallthru
      _
    // Predicated region
    $region14: #{tpu_custom_call.1} parent=1 // pred_check
      _
    $region15: #{tpu_custom_call.1} parent=1 // pred_check_branch
      %36 = sbr.rel (0) target = $region17
    $region16: #{tpu_custom_call.1} parent=1 // pred_region
      %37 = dma.done [#allocation3], 128
    $region17: #{tpu_custom_call.1} parent=1 // pred_fallthru
      _
    // Predicated region
    $region18: #{tpu_custom_call.1} parent=1 // pred_check
      _
    $region19: #{tpu_custom_call.1} parent=1 // pred_check_branch
      %39 = sbr.rel (0) target = $region21
    $region20: #{tpu_custom_call.1} parent=1 // pred_region
      %40 = dma.done [#allocation6], 2048
    $region21: #{tpu_custom_call.1} parent=1 // pred_fallthru
      _
    %v41 = vld [vmem:[#allocation5] sm:$0xff]
    %v42 = vld [vmem:[#allocation5 + $0x8] sm:$0xff]
    %v43 = vld [vmem:[#allocation5 + $0x10] sm:$0xff]
    %v44 = vld [vmem:[#allocation5 + $0x18] sm:$0xff]
    %v45 = vld [vmem:[#allocation5 + $0x20] sm:$0xff]
    %v46 = vld [vmem:[#allocation5 + $0x28] sm:$0xff]
    %v47 = vld [vmem:[#allocation5 + $0x30] sm:$0xff]
    %v48 = vld [vmem:[#allocation5 + $0x38] sm:$0xff]
    %v49 = vld [vmem:[#allocation5 + $0x40] sm:$0xff]
    %v50 = vld [vmem:[#allocation5 + $0x48] sm:$0xff]
    %v51 = vld [vmem:[#allocation5 + $0x50] sm:$0xff]
    %v52 = vld [vmem:[#allocation5 + $0x58] sm:$0xff]
    %v53 = vld [vmem:[#allocation5 + $0x60] sm:$0xff]
    %v54 = vld [vmem:[#allocation5 + $0x68] sm:$0xff]
    %v55 = vld [vmem:[#allocation5 + $0x70] sm:$0xff]
    %v56 = vld [vmem:[#allocation5 + $0x78] sm:$0xff]
    %v57 = vld [vmem:[#allocation2] sm:$0xff]
    %v58 = vmul.f32 %v41, %v41
    %v59 = vmul.f32 %v42, %v42
    %v60 = vmul.f32 %v43, %v43
    %v61 = vmul.f32 %v44, %v44
    %v62 = vmul.f32 %v45, %v45
    %v63 = vmul.f32 %v46, %v46
    %v64 = vmul.f32 %v47, %v47
    %v65 = vmul.f32 %v48, %v48
    %v66 = vmul.f32 %v49, %v49
    %v67 = vmul.f32 %v50, %v50
    %v68 = vmul.f32 %v51, %v51
    %v69 = vmul.f32 %v52, %v52
    %v70 = vmul.f32 %v53, %v53
    %v71 = vmul.f32 %v54, %v54
    %v72 = vmul.f32 %v55, %v55
    %v73 = vmul.f32 %v56, %v56
    %74 = vmatprep.subr.mxu0 0.0
    %75 = vmatpush1.xpose.msra.mxu0 %v73
    %76 = vmatprep.subr.mxu0 0.0
    %77 = vmatpush1.xpose.msra.mxu0 %v72
    %78 = vmatprep.subr.mxu0 0.0
    %79 = vmatpush1.xpose.msra.mxu0 %v71
    %80 = vmatprep.subr.mxu0 0.0
    %81 = vmatpush1.xpose.msra.mxu0 %v70
    %82 = vmatprep.subr.mxu0 0.0
    %83 = vmatpush1.xpose.msra.mxu0 %v69
    %84 = vmatprep.subr.mxu0 0.0
    %85 = vmatpush1.xpose.msra.mxu0 %v68
    %86 = vmatprep.subr.mxu0 0.0
    %87 = vmatpush1.xpose.msra.mxu0 %v67
    %88 = vmatprep.subr.mxu0 0.0
    %89 = vmatpush1.xpose.msra.mxu0 %v66
    %90 = vmatprep.subr.mxu0 0.0
    %91 = vmatpush1.xpose.msra.mxu0 %v65
    %92 = vmatprep.subr.mxu0 0.0
    %93 = vmatpush1.xpose.msra.mxu0 %v64
    %94 = vmatprep.subr.mxu0 0.0
    %95 = vmatpush1.xpose.msra.mxu0 %v63
    %96 = vmatprep.subr.mxu0 0.0
    %97 = vmatpush1.xpose.msra.mxu0 %v62
    %98 = vmatprep.subr.mxu0 0.0
    %99 = vmatpush1.xpose.msra.mxu0 %v61
    %100 = vmatprep.subr.mxu0 0.0
    %101 = vmatpush1.xpose.msra.mxu0 %v60
    %102 = vmatprep.subr.mxu0 0.0
    %103 = vmatpush1.xpose.msra.mxu0 %v59
    %104 = vmatprep.subr.mxu0 0.0
    %105 = vmatpush1.xpose.msra.mxu0 %v58
    %106 = vmatprep.subr.mxu0 0.0
    %107 = vmatpush2.xpose.msra.mxu0 0.0
    %108 = vmatprep.subr.mxu0 0.0
    %109 = vmatpush2.xpose.msra.mxu0 0.0
    %110 = vmatprep.subr.mxu0 0.0
    %111 = vmatpush2.xpose.msra.mxu0 0.0
    %112 = vmatprep.subr.mxu0 0.0
    %113 = vmatpush2.xpose.msra.mxu0 0.0
    %114 = vmatprep.subr.mxu0 0.0
    %115 = vmatpush2.xpose.msra.mxu0 0.0
    %116 = vmatprep.subr.mxu0 0.0
    %117 = vmatpush2.xpose.msra.mxu0 0.0
    %118 = vmatprep.subr.mxu0 0.0
    %119 = vmatpush2.xpose.msra.mxu0 0.0
    %120 = vmatprep.subr.mxu0 0.0
    %121 = vmatpush2.xpose.msra.mxu0 0.0
    %122 = vmatprep.subr.mxu0 0.0
    %123 = vmatpush2.xpose.msra.mxu0 0.0
    %124 = vmatprep.subr.mxu0 0.0
    %125 = vmatpush2.xpose.msra.mxu0 0.0
    %126 = vmatprep.subr.mxu0 0.0
    %127 = vmatpush2.xpose.msra.mxu0 0.0
    %128 = vmatprep.subr.mxu0 0.0
    %129 = vmatpush2.xpose.msra.mxu0 0.0
    %130 = vmatprep.subr.mxu0 0.0
    %131 = vmatpush2.xpose.msra.mxu0 0.0
    %132 = vmatprep.subr.mxu0 0.0
    %133 = vmatpush2.xpose.msra.mxu0 0.0
    %134 = vmatprep.subr.mxu0 0.0
    %135 = vmatpush2.xpose.msra.mxu0 0.0
    %136 = vmatprep.subr.mxu0 0.0
    %137 = vmatpush2.xpose.msra.mxu0 0.0
    %138 = vmatprep.mubr.f32.mxu0 0.0
    %139 = vmatmul.mubr.f32.gmra.mxu0 %v57
    %v140 = vpop.f32.mrf.mxu0
    %v141 = vadd.f32 0.0, %v140
    %v142 = vpop.f32.mrf.mxu0
    %143 = vdwg.mxu0
    %p144 = scmp.eq.s32.totalorder 0, 0
    // Predicated region
    $region22: #{tpu_custom_call.1} parent=1 // pred_check
      %p145 = pneg %p144
    $region23: #{tpu_custom_call.1} parent=1 // pred_check_branch
      %147 = sbr.rel (%p145) target = $region25
    $region24: #{tpu_custom_call.1} parent=1 // pred_region
      %148 = vst [vmem:[#allocation7] sm:$0xff] %v141
    $region25: #{tpu_custom_call.1} parent=1 // pred_fallthru
      _
    %p149 = scmp.gt.s32.totalorder 0, 0
    // Predicated region
    $region26: #{tpu_custom_call.1} parent=1 // pred_check
      %p150 = pneg %p149
    $region27: #{tpu_custom_call.1} parent=1 // pred_check_branch
      %152 = sbr.rel (%p150) target = $region29
    $region28: #{tpu_custom_call.1} parent=1 // pred_region
      %v153 = vld [vmem:[#allocation7] sm:$0xff]
      %v154 = vadd.f32 %v153, %v141
      %155 = vst [vmem:[#allocation7] sm:$0xff] %v154
    $region29: #{tpu_custom_call.1} parent=1 // pred_fallthru
      _
    // Predicated region
    $region30: #{tpu_custom_call.1} parent=1 // pred_check
      %p156 = pneg %p144
    $region31: #{tpu_custom_call.1} parent=1 // pred_check_branch
      %158 = sbr.rel (%p156) target = $region33
    $region32: #{tpu_custom_call.1} parent=1 // pred_region
      %v159 = vld [vmem:[#allocation7] sm:$0xff]
      %v160 = vld [vmem:[%s2] sm:$0x1]
      %v162 = vlaneseq
      %v163 = vshrl.u32 %v162, 7
      %v164 = vsub.s32 0, %v163
      %v165 = vrot.slane %v160, %v164
      %v167 = vadd.f32 %v159, %v165
      %v168 = vtanh.pop %v167
      %169 = vst [vmem:[#allocation7] sm:$0xff] %v168
    $region33: #{tpu_custom_call.1} parent=1 // pred_fallthru
      _
    // Predicated region
    $region34: #{tpu_custom_call.1} parent=1 // pred_check
      _
    $region35: #{tpu_custom_call.1} parent=1 // pred_check_branch
      %171 = sbr.rel (0) target = $region37
    $region36: #{tpu_custom_call.1} parent=1 // pred_region
      %s173 = ssub.s32 128, 128
      %174 = vsyncadd [#allocation4], %s173
      %s176 = sshll.u32 [#allocation7], 4
      %s177 = int_to_ptr.vmem [resolvable:$true] %s176
      %179 = dma.vmem_to_hbm [thread:$0]  %s177, 128, %s3, [#allocation4]
    $region37: #{tpu_custom_call.1} parent=1 // pred_fallthru
      _
    // Predicated region
    $region38: #{tpu_custom_call.1} parent=1 // pred_check
      _
    $region39: #{tpu_custom_call.1} parent=1 // pred_check_branch
      %181 = sbr.rel (0) target = $region41
    $region40: #{tpu_custom_call.1} parent=1 // pred_region
      %182 = dma.done [#allocation4], 128
    $region41: #{tpu_custom_call.1} parent=1 // pred_fallthru
      _
    %183 = vsyncpa [#allocation3], 1
    %184 = vsyncpa [#allocation6], 1
    %185 = vsyncpa [#allocation4], 1

</llo_original>
